<compile_context>
chip_gen: v6e
topology: v6e:2x2x1
jax: 0.10.0
libtpu: 0.0.40
codegen_flags: <defaults>
</compile_context>

<pallas_src>
import jax
import jax.numpy as jnp
from jax.experimental import pallas as pl
from jax.experimental.pallas import tpu as pltpu


# ---------------------------------------------------------------------------
# Kernels
# ---------------------------------------------------------------------------

def _pos_embed_kernel_densew(col_t_ref, row_t_ref, out_ref):
    """W % 128 == 0 fast path: natural (2C, block_h, W) output block.

    col_t_ref: (C, W)           col_embed[:W].T        (grid-invariant)
    row_t_ref: (1, C, block_h)  this tile's rows of row_embed.T
    out_ref:   (2C, block_h, W)
    """
    c, w = col_t_ref.shape
    block_h = row_t_ref.shape[-1]
    # x half: pos[ch, y, x] = col_embed[x, ch]  -> cheap sublane splat along y.
    out_ref[pl.ds(0, c), :, :] = jnp.broadcast_to(
        col_t_ref[...][:, None, :], (c, block_h, w))
    # y half: pos[C+ch, y, x] = row_embed[y, ch] -> cheap lane splat along x.
    out_ref[pl.ds(c, c), :, :] = jnp.broadcast_to(
        row_t_ref[0][:, :, None], (c, block_h, w))


def _pos_embed_kernel_flat(x_slab_ref, row_t_ref, out_ref):
    """W % 128 != 0 path: lane-dense flattened (2C, block_h*W) output block.

    x_slab_ref: (C, block_h*W)   col table pre-tiled in the wrapper (invariant)
    row_t_ref:  (1, C, block_h)  this tile's rows of row_embed.T
    out_ref:    (2C, block_h*W)
    """
    c, flat = x_slab_ref.shape
    block_h = row_t_ref.shape[-1]
    w = flat // block_h
    # x half: grid-invariant pre-tiled slab -> straight vld -> vst copy.
    # (No per-step relayout and no concat temporary.)
    out_ref[pl.ds(0, c), :] = x_slab_ref[...]
    # y half: lane splat then flatten.  The flatten is the one remaining
    # cross-lane relayout; it could be moved to the otherwise-idle MXU with a
    # 0/1 selection matmul (row_blk @ onehot), but the splat keeps the kernel
    # bit-exact vs. the f32 reference without relying on f32-matmul pass
    # behaviour.
    y = jnp.broadcast_to(row_t_ref[0][:, :, None], (c, block_h, w))
    out_ref[pl.ds(c, c), :] = y.reshape(c, block_h * w)


# ---------------------------------------------------------------------------
# Tiling / VMEM heuristics (generation-aware)
# ---------------------------------------------------------------------------

def _device_kind():
    try:
        return jax.devices()[0].device_kind.lower()
    except Exception:
        return ""


def _vmem_soft_budget(kind):
    if "v7" in kind:
        return 20 << 20          # 64 MiB physical on v7x: leave headroom
    if "v5 lite" in kind or "v5lite" in kind or "v5e" in kind:
        return 12 << 20          # 16 MiB scoped default, lowest HBM BW
    if "v6" in kind:
        return 28 << 20          # 128 MiB physical: big tiles ~ HBM roofline
    return 16 << 20


def _vmem_hard_cap(kind):
    return (48 << 20) if "v7" in kind else (100 << 20)


def _vmem_block_bytes(block_h, *, c, w, flattened, itemsize=4):
    out = 2 * (2 * c) * block_h * w        # double-buffered output block
    row = 2 * c * block_h                  # double-buffered row-table tile
    if flattened:
        inv = 2 * c * block_h * w          # x_slab (grid-invariant col slab)
    else:
        inv = 2 * c * w                    # col table
    tmp = 2 * c * block_h * w              # in-kernel broadcast temporaries
    return (out + row + inv + tmp) * itemsize


def _legal_block(block_h, h, w, flattened):
    if block_h <= 0 or h % block_h:
        return False
    if block_h == h:
        return True                        # full-extent block always legal
    if flattened:
        return (block_h * w) % 128 == 0    # lane-dense, unmasked stores
    return block_h % 8 == 0                # sublane tiling rule for 3-D block


def _choose_block_h(h, w, c, *, flattened, kind):
    budget = _vmem_soft_budget(kind)
    cands = [th for th in range(h, 0, -1) if _legal_block(th, h, w, flattened)]
    fits = [th for th in cands
            if _vmem_block_bytes(th, c=c, w=w, flattened=flattened) <= budget]
    # v7x megacore: prefer >= 2 grid steps so ("parallel",) shards the
    # writeback over both TensorCores even when the full slab would fit.
    if "v7" in kind:
        multi = [th for th in fits if h // th >= 2]
        if multi:
            return multi[0]
    if fits:
        return fits[0]
    # Nothing fits the soft budget: take the smallest legal tile (never the
    # old silent full-slab fallback); the wrapper raises on the hard cap.
    return cands[-1]


# ---------------------------------------------------------------------------
# Wrapper (forward pass of PositionEmbeddingLearned)
# ---------------------------------------------------------------------------

def position_embedding_learned(mask, row_weight, col_weight, *, block_h=None):
    """Replicates PositionEmbeddingLearned.forward.

    mask:       (B, H, W)  -- only the shape is used, as in the PyTorch module
    row_weight: (num_embeddings, C) -- row_embed.weight
    col_weight: (num_embeddings, C) -- col_embed.weight
    returns:    (B, 2*C, H, W) float32
    """
    b = mask.shape[0]
    h, w = int(mask.shape[-2]), int(mask.shape[-1])
    c = row_weight.shape[1]
    if col_weight.shape[1] != c:
        raise ValueError("row_embed / col_embed feature dims differ")
    if h > row_weight.shape[0] or w > col_weight.shape[0]:
        raise ValueError(
            f"spatial size ({h},{w}) exceeds num_embeddings "
            f"({row_weight.shape[0]},{col_weight.shape[0]})")

    flattened = (w % 128) != 0
    kind = _device_kind()
    if block_h is None:
        block_h = _choose_block_h(h, w, c, flattened=flattened, kind=kind)
    if not _legal_block(block_h, h, w, flattened):
        raise ValueError(
            f"block_h={block_h} invalid for H={h}, W={w} "
            f"(must divide H and keep blocks (8,128)-legal / lane-dense)")
    n_tiles = h // block_h

    est = _vmem_block_bytes(block_h, c=c, w=w, flattened=flattened)
    hard_cap = _vmem_hard_cap(kind)
    if est > hard_cap:
        raise ValueError(
            f"position-embedding tile needs ~{est} bytes of VMEM, above the "
            f"{hard_cap} byte cap for this device; reduce H/W/num_pos_feats")
    vmem_limit = int(min(hard_cap, max(32 << 20, 2 * est)))

    # Wrapper-side glue on tiny (<= num_embeddings x C) tables: arange lookup
    # == leading-row slice; transpose so channels land on sublanes and the
    # kernel body needs no in-kernel transposes.
    col_t = col_weight[:w].astype(jnp.float32).T                        # (C, W)
    row_t = row_weight[:h].astype(jnp.float32).T                        # (C, H)
    row_tiles = row_t.reshape(c, n_tiles, block_h).transpose(1, 0, 2)   # (T, C, bh)

    compiler_params = pltpu.CompilerParams(
        dimension_semantics=("parallel",),
        vmem_limit_bytes=vmem_limit,
    )

    if not flattened:
        # ---- W already lane-dense: keep natural (2C, H, W) layout ----------
        pos = pl.pallas_call(
            _pos_embed_kernel_densew,
            out_shape=jax.ShapeDtypeStruct((2 * c, h, w), jnp.float32),
            grid_spec=pltpu.PrefetchScalarGridSpec(
                num_scalar_prefetch=0,
                grid=(n_tiles,),
                in_specs=[
                    pl.BlockSpec((c, w), lambda i: (0, 0)),              # invariant
                    pl.BlockSpec((1, c, block_h), lambda i: (i, 0, 0)),  # per tile
                ],
                out_specs=pl.BlockSpec((2 * c, block_h, w), lambda i: (0, i, 0)),
            ),
            compiler_params=compiler_params,
            cost_estimate=pl.CostEstimate(
                flops=0, transcendentals=0,
                bytes_accessed=(2 * c * h * w + c * (h + w)) * 4),
        )(col_t, row_tiles)
    else:
        # ---- W < / not multiple of 128: flatten spatial dims for lane-dense
        #      unmasked stores; the x half is a pre-tiled, grid-invariant slab.
        x_slab = jnp.tile(col_t, (1, block_h))                           # (C, bh*W)
        flat = pl.pallas_call(
            _pos_embed_kernel_flat,
            out_shape=jax.ShapeDtypeStruct((2 * c, h * w), jnp.float32),
            grid_spec=pltpu.PrefetchScalarGridSpec(
                num_scalar_prefetch=0,
                grid=(n_tiles,),
                in_specs=[
                    pl.BlockSpec((c, block_h * w), lambda i: (0, 0)),    # invariant
                    pl.BlockSpec((1, c, block_h), lambda i: (i, 0, 0)),  # per tile
                ],
                out_specs=pl.BlockSpec((2 * c, block_h * w), lambda i: (0, i)),
            ),
            compiler_params=compiler_params,
            cost_estimate=pl.CostEstimate(
                flops=0, transcendentals=0,
                bytes_accessed=(2 * c * h * w + c * block_h * w + c * h) * 4),
        )(x_slab, row_tiles)
        pos = flat.reshape(2 * c, h, w)                # free metadata reshape

    # Batch copies are identical -> lazy broadcast outside the kernel.  The
    # result depends only on (H, W) and the two tiny weight tables, so callers
    # should hoist/cache it per feature-map shape outside the per-step jit.
    return jnp.broadcast_to(pos[None], (b, 2 * c, h, w))


# ---------------------------------------------------------------------------
# Pure-JAX reference of the PyTorch forward pass
# ---------------------------------------------------------------------------

def reference(mask, row_weight, col_weight):
    b = mask.shape[0]
    h, w = mask.shape[-2], mask.shape[-1]
    x_emb = col_weight[jnp.arange(w)]  # (W, C)
    y_emb = row_weight[jnp.arange(h)]  # (H, C)
    pos = jnp.concatenate(
        [
            jnp.broadcast_to(x_emb[None, :, :], (h, w, x_emb.shape[-1])),
            jnp.broadcast_to(y_emb[:, None, :], (h, w, y_emb.shape[-1])),
        ],
        axis=-1,
    )  # (H, W, 2C)
    pos = jnp.transpose(pos, (2, 0, 1))[None]  # (1, 2C, H, W)
    return jnp.broadcast_to(pos, (b,) + pos.shape[1:]).astype(jnp.float32)


if __name__ == "__main__":
    key = jax.random.PRNGKey(0)
    k_row, k_col, k_row2, k_col2, k_mask = jax.random.split(key, 5)

    # ---- Flattened path (W % 128 != 0): typical small DETR feature map -----
    num_embeddings, C = 50, 32          # module default num_pos_feats=256; small here
    B, H, W = 2, 16, 16
    row_w = jax.random.uniform(k_row, (num_embeddings, C), jnp.float32)  # nn.init.uniform_
    col_w = jax.random.uniform(k_col, (num_embeddings, C), jnp.float32)
    mask = jax.random.bernoulli(k_mask, 0.5, (B, H, W))                  # values unused
    ref = reference(mask, row_w, col_w)

    out_auto = jax.block_until_ready(position_embedding_learned(mask, row_w, col_w))
    assert out_auto.shape == (B, 2 * C, H, W), out_auto.shape
    assert out_auto.dtype == jnp.float32
    assert jnp.allclose(out_auto, ref, rtol=1e-6, atol=1e-6), "flat auto mismatch"

    out_tiled = jax.block_until_ready(
        position_embedding_learned(mask, row_w, col_w, block_h=8))       # grid of 2
    assert jnp.allclose(out_tiled, ref, rtol=1e-6, atol=1e-6), "flat tiled mismatch"

    # ---- Lane-dense fast path (W % 128 == 0) --------------------------------
    num_embeddings2 = 128
    H2, W2 = 16, 128
    row_w2 = jax.random.uniform(k_row2, (num_embeddings2, C), jnp.float32)
    col_w2 = jax.random.uniform(k_col2, (num_embeddings2, C), jnp.float32)
    mask2 = jnp.zeros((B, H2, W2), jnp.bool_)
    ref2 = reference(mask2, row_w2, col_w2)

    out2 = jax.block_until_ready(position_embedding_learned(mask2, row_w2, col_w2))
    assert out2.shape == (B, 2 * C, H2, W2), out2.shape
    assert out2.dtype == jnp.float32
    assert jnp.allclose(out2, ref2, rtol=1e-6, atol=1e-6), "dense-W auto mismatch"

    out2_t = jax.block_until_ready(
        position_embedding_learned(mask2, row_w2, col_w2, block_h=8))    # grid of 2
    assert jnp.allclose(out2_t, ref2, rtol=1e-6, atol=1e-6), "dense-W tiled mismatch"

    print("KERNEL_OK")
</pallas_src>

<mosaic_0001>
module attributes {stable_mosaic.version = 11 : i64} {
  func.func @_pos_embed_kernel_flat(%arg0: i32, %arg1: memref<32x256xf32, #tpu.memory_space<vmem>>, %arg2: memref<1x32x16xf32, #tpu.memory_space<vmem>>, %arg3: memref<64x256xf32, #tpu.memory_space<vmem>>) attributes {dimension_semantics = [#tpu.dimension_semantics<parallel>], iteration_bounds = array<i64: 1>, scalar_prefetch = 0 : i64, scratch_operands = 0 : i64, tpu.core_type = #tpu.core_type<tc>, window_params = [{pipeline_mode = #tpu.pipeline_mode<synchronous>, transform_indices = @transform_0, window_bounds = array<i64: 32, 256>}, {transform_indices = @transform_1, window_bounds = array<i64: 1, 32, 16>}, {transform_indices = @transform_2, window_bounds = array<i64: 64, 256>}]} {
    %c0 = arith.constant 0 : index
    %c0_0 = arith.constant 0 : index
    %0 = vector.load %arg1[%c0, %c0_0] : memref<32x256xf32, #tpu.memory_space<vmem>>, vector<32x256xf32>
    %c0_1 = arith.constant 0 : index
    %c0_2 = arith.constant 0 : index
    %1 = vector.load %arg3[%c0_1, %c0_2] : memref<64x256xf32, #tpu.memory_space<vmem>>, vector<32x256xf32>
    tpu.vector_store %arg3[%c0_1, %c0_2], %0 {strides = array<i32>} : memref<64x256xf32, #tpu.memory_space<vmem>>, vector<32x256xf32>,
    %c0_3 = arith.constant 0 : index
    %c0_4 = arith.constant 0 : index
    %c0_5 = arith.constant 0 : index
    %2 = vector.load %arg2[%c0_3, %c0_4, %c0_5] : memref<1x32x16xf32, #tpu.memory_space<vmem>>, vector<1x32x16xf32>
    %3 = vector.shape_cast %2 : vector<1x32x16xf32> to vector<32x16xf32>
    %4 = vector.shape_cast %3 : vector<32x16xf32> to vector<32x16x1xf32>
    %5 = vector.shape_cast %4 : vector<32x16x1xf32> to vector<32x16x1xf32>
    %6 = vector.broadcast %5 : vector<32x16x1xf32> to vector<32x16x16xf32>
    %7 = vector.shape_cast %6 : vector<32x16x16xf32> to vector<32x256xf32>
    %c32 = arith.constant 32 : index
    %c0_6 = arith.constant 0 : index
    %8 = vector.load %arg3[%c32, %c0_6] : memref<64x256xf32, #tpu.memory_space<vmem>>, vector<32x256xf32>
    tpu.vector_store %arg3[%c32, %c0_6], %7 {strides = array<i32>} : memref<64x256xf32, #tpu.memory_space<vmem>>, vector<32x256xf32>,
    return
  }
  func.func @transform_0(%arg0: i32) -> (i32, i32) {
    %c0_i32 = arith.constant 0 : i32
    %c0_i32_0 = arith.constant 0 : i32
    %c0_i32_1 = arith.constant 0 : i32
    return %c0_i32, %c0_i32_0 : i32, i32
  }
  func.func @transform_1(%arg0: i32) -> (i32, i32, i32) {
    %c0_i32 = arith.constant 0 : i32
    %c0_i32_0 = arith.constant 0 : i32
    %c0_i32_1 = arith.constant 0 : i32
    return %arg0, %c0_i32, %c0_i32_0 : i32, i32, i32
  }
  func.func @transform_2(%arg0: i32) -> (i32, i32) {
    %c0_i32 = arith.constant 0 : i32
    %c0_i32_0 = arith.constant 0 : i32
    return %c0_i32, %arg0 : i32, i32
  }
}

</mosaic_0001>

<llo_original>
// kernel: tpu_custom_call.1
$region0: #{tpu_custom_call.1}
  #allocation0 [shape = 'u32[]', space=smem, size = 0x4, offset = 0x4, fixed_abs, tag = 'smem constant byte address 0x4 - core index']
  #allocation1 [shape = 'u32[144,128]{1,0:T(1,128)}', space=vmem, size = 0x12000, scoped, tag = 'internal scratch']
  %s0 = inlined_call_operand.hbm [shape: f32[32,256], index: 0, kind: input, shape index: {}]
  %s1 = inlined_call_operand.vmem [shape: f32[1,32,16], index: 1, kind: input, shape index: {}]
  %s2 = inlined_call_operand.hbm [shape: f32[64,256], index: 2, kind: output, shape index: {}]
  %s3 = sld [smem:[#allocation0]]
  $region22: #{tpu_custom_call.1} parent=0
    _
  %s5 = ssub.s32 1, %s3
  %s6 = scalar_select 0, %s5, %s3
  $region1: #{tpu_custom_call.1} parent=0
    #allocation2 [shape = 'u8[32768]{0}', space=vmem, size = 0x8000, scoped, tag = 'input window, operand 0, single buffered']
    #allocation3 [shape = 's32[1]{0}', space=sflag, size = 0x4, scoped, tag = 'scoped memory for tpu_custom_call.1']
    #allocation4 [shape = 's32[1]{0}', space=sflag, size = 0x4, scoped, tag = 'scoped memory for tpu_custom_call.1']
    #allocation5 [shape = 'u8[65536]{0}', space=vmem, size = 0x10000, scoped, tag = 'output window, operand 0, single buffered']
    %7 = vsyncpa [#allocation3], 0
    %8 = vsyncpa [#allocation4], 0
    // Predicated region
    $region2: #{tpu_custom_call.1} parent=1 // pred_check
      _
    $region3: #{tpu_custom_call.1} parent=1 // pred_check_branch
      %10 = sbr.rel (0) target = $region5
    $region4: #{tpu_custom_call.1} parent=1 // pred_region
      %s12 = ssub.s32 1024, 1024
      %13 = vsyncadd [#allocation3], %s12
      %s14 = sshll.u32 [#allocation2], 4
      %s15 = int_to_ptr.vmem [resolvable:$true] %s14
      %20 = dma.hbm_to_vmem [thread:$0]  %s0, 1024, %s15, [#allocation3], 256, 256, 16
    $region5: #{tpu_custom_call.1} parent=1 // pred_fallthru
      _
    // Predicated region
    $region6: #{tpu_custom_call.1} parent=1 // pred_check
      _
    $region7: #{tpu_custom_call.1} parent=1 // pred_check_branch
      %22 = sbr.rel (0) target = $region9
    $region8: #{tpu_custom_call.1} parent=1 // pred_region
      _
    $region9: #{tpu_custom_call.1} parent=1 // pred_fallthru
      _
    // Predicated region
    $region10: #{tpu_custom_call.1} parent=1 // pred_check
      _
    $region11: #{tpu_custom_call.1} parent=1 // pred_check_branch
      %24 = sbr.rel (0) target = $region13
    $region12: #{tpu_custom_call.1} parent=1 // pred_region
      %25 = dma.done [#allocation3], 1024
    $region13: #{tpu_custom_call.1} parent=1 // pred_fallthru
      _
    %v26 = vld [vmem:[#allocation2] sm:$0xff]
    %v27 = vld [vmem:[#allocation2 + $0x8] sm:$0xff]
    %v28 = vld [vmem:[#allocation2 + $0x10] sm:$0xff]
    %v29 = vld [vmem:[#allocation2 + $0x18] sm:$0xff]
    %v30 = vld [vmem:[#allocation2 + $0x20] sm:$0xff]
    %v31 = vld [vmem:[#allocation2 + $0x28] sm:$0xff]
    %v32 = vld [vmem:[#allocation2 + $0x30] sm:$0xff]
    %v33 = vld [vmem:[#allocation2 + $0x38] sm:$0xff]
    %34 = vst [vmem:[#allocation5] sm:$0xff] %v26
    %35 = vst [vmem:[#allocation5 + $0x8] sm:$0xff] %v27
    %36 = vst [vmem:[#allocation5 + $0x10] sm:$0xff] %v28
    %37 = vst [vmem:[#allocation5 + $0x18] sm:$0xff] %v29
    %38 = vst [vmem:[#allocation5 + $0x20] sm:$0xff] %v30
    %39 = vst [vmem:[#allocation5 + $0x28] sm:$0xff] %v31
    %40 = vst [vmem:[#allocation5 + $0x30] sm:$0xff] %v32
    %41 = vst [vmem:[#allocation5 + $0x38] sm:$0xff] %v33
    %v42 = vld [vmem:[%s1] sm:$0xff]
    %v43 = vld [vmem:[%s1 + $0x8] sm:$0xff]
    %v44 = vld [vmem:[%s1 + $0x10] sm:$0xff]
    %v45 = vld [vmem:[%s1 + $0x18] sm:$0xff]
    %v46 = vlaneseq
    %v47 = vshrl.u32 %v46, 7
    %v48 = vsub.s32 0, %v47
    %v49 = vrot.slane %v42, %v48
    %51 = vbcast.lane.b32.xlu0 %v49, 256
    %v52 = vpop.permute.xlu0 %51
    %s54 = sor.u32 256, 8
    %55 = vbcast.lane.b32.xlu0 %v49, %s54
    %v56 = vpop.permute.xlu0 %55
    %v57 = vlaneseq
    %v58 = vshrl.u32 %v57, 7
    %v59 = vsub.s32 1, %v58
    %v60 = vrot.slane %v42, %v59
    %62 = vbcast.lane.b32.xlu0 %v60, 256
    %v63 = vpop.permute.xlu0 %62
    %s65 = sor.u32 256, 8
    %66 = vbcast.lane.b32.xlu0 %v60, %s65
    %v67 = vpop.permute.xlu0 %66
    %v68 = vlaneseq
    %v69 = vshrl.u32 %v68, 7
    %v70 = vsub.s32 2, %v69
    %v71 = vrot.slane %v42, %v70
    %73 = vbcast.lane.b32.xlu0 %v71, 256
    %v74 = vpop.permute.xlu0 %73
    %s76 = sor.u32 256, 8
    %77 = vbcast.lane.b32.xlu0 %v71, %s76
    %v78 = vpop.permute.xlu0 %77
    %v79 = vlaneseq
    %v80 = vshrl.u32 %v79, 7
    %v81 = vsub.s32 3, %v80
    %v82 = vrot.slane %v42, %v81
    %84 = vbcast.lane.b32.xlu0 %v82, 256
    %v85 = vpop.permute.xlu0 %84
    %s87 = sor.u32 256, 8
    %88 = vbcast.lane.b32.xlu0 %v82, %s87
    %v89 = vpop.permute.xlu0 %88
    %v90 = vlaneseq
    %v91 = vshrl.u32 %v90, 7
    %v92 = vsub.s32 4, %v91
    %v93 = vrot.slane %v42, %v92
    %95 = vbcast.lane.b32.xlu0 %v93, 256
    %v96 = vpop.permute.xlu0 %95
    %s98 = sor.u32 256, 8
    %99 = vbcast.lane.b32.xlu0 %v93, %s98
    %v100 = vpop.permute.xlu0 %99
    %v101 = vlaneseq
    %v102 = vshrl.u32 %v101, 7
    %v103 = vsub.s32 5, %v102
    %v104 = vrot.slane %v42, %v103
    %106 = vbcast.lane.b32.xlu0 %v104, 256
    %v107 = vpop.permute.xlu0 %106
    %s109 = sor.u32 256, 8
    %110 = vbcast.lane.b32.xlu0 %v104, %s109
    %v111 = vpop.permute.xlu0 %110
    %v112 = vlaneseq
    %v113 = vshrl.u32 %v112, 7
    %v114 = vsub.s32 6, %v113
    %v115 = vrot.slane %v42, %v114
    %117 = vbcast.lane.b32.xlu0 %v115, 256
    %v118 = vpop.permute.xlu0 %117
    %s120 = sor.u32 256, 8
    %121 = vbcast.lane.b32.xlu0 %v115, %s120
    %v122 = vpop.permute.xlu0 %121
    %v123 = vlaneseq
    %v124 = vshrl.u32 %v123, 7
    %v125 = vsub.s32 7, %v124
    %v126 = vrot.slane %v42, %v125
    %128 = vbcast.lane.b32.xlu0 %v126, 256
    %v129 = vpop.permute.xlu0 %128
    %s131 = sor.u32 256, 8
    %132 = vbcast.lane.b32.xlu0 %v126, %s131
    %v133 = vpop.permute.xlu0 %132
    %v134 = vlaneseq
    %v135 = vshrl.u32 %v134, 7
    %v136 = vsub.s32 0, %v135
    %v137 = vrot.slane %v43, %v136
    %139 = vbcast.lane.b32.xlu0 %v137, 256
    %v140 = vpop.permute.xlu0 %139
    %s142 = sor.u32 256, 8
    %143 = vbcast.lane.b32.xlu0 %v137, %s142
    %v144 = vpop.permute.xlu0 %143
    %v145 = vlaneseq
    %v146 = vshrl.u32 %v145, 7
    %v147 = vsub.s32 1, %v146
    %v148 = vrot.slane %v43, %v147
    %150 = vbcast.lane.b32.xlu0 %v148, 256
    %v151 = vpop.permute.xlu0 %150
    %s153 = sor.u32 256, 8
    %154 = vbcast.lane.b32.xlu0 %v148, %s153
    %v155 = vpop.permute.xlu0 %154
    %v156 = vlaneseq
    %v157 = vshrl.u32 %v156, 7
    %v158 = vsub.s32 2, %v157
    %v159 = vrot.slane %v43, %v158
    %161 = vbcast.lane.b32.xlu0 %v159, 256
    %v162 = vpop.permute.xlu0 %161
    %s164 = sor.u32 256, 8
    %165 = vbcast.lane.b32.xlu0 %v159, %s164
    %v166 = vpop.permute.xlu0 %165
    %v167 = vlaneseq
    %v168 = vshrl.u32 %v167, 7
    %v169 = vsub.s32 3, %v168
    %v170 = vrot.slane %v43, %v169
    %172 = vbcast.lane.b32.xlu0 %v170, 256
    %v173 = vpop.permute.xlu0 %172
    %s175 = sor.u32 256, 8
    %176 = vbcast.lane.b32.xlu0 %v170, %s175
    %v177 = vpop.permute.xlu0 %176
    %v178 = vlaneseq
    %v179 = vshrl.u32 %v178, 7
    %v180 = vsub.s32 4, %v179
    %v181 = vrot.slane %v43, %v180
    %183 = vbcast.lane.b32.xlu0 %v181, 256
    %v184 = vpop.permute.xlu0 %183
    %s186 = sor.u32 256, 8
    %187 = vbcast.lane.b32.xlu0 %v181, %s186
    %v188 = vpop.permute.xlu0 %187
    %v189 = vlaneseq
    %v190 = vshrl.u32 %v189, 7
    %v191 = vsub.s32 5, %v190
    %v192 = vrot.slane %v43, %v191
    %194 = vbcast.lane.b32.xlu0 %v192, 256
    %v195 = vpop.permute.xlu0 %194
    %s197 = sor.u32 256, 8
    %198 = vbcast.lane.b32.xlu0 %v192, %s197
    %v199 = vpop.permute.xlu0 %198
    %v200 = vlaneseq
    %v201 = vshrl.u32 %v200, 7
    %v202 = vsub.s32 6, %v201
    %v203 = vrot.slane %v43, %v202
    %205 = vbcast.lane.b32.xlu0 %v203, 256
    %v206 = vpop.permute.xlu0 %205
    %s208 = sor.u32 256, 8
    %209 = vbcast.lane.b32.xlu0 %v203, %s208
    %v210 = vpop.permute.xlu0 %209
    %v211 = vlaneseq
    %v212 = vshrl.u32 %v211, 7
    %v213 = vsub.s32 7, %v212
    %v214 = vrot.slane %v43, %v213
    %216 = vbcast.lane.b32.xlu0 %v214, 256
    %v217 = vpop.permute.xlu0 %216
    %s219 = sor.u32 256, 8
    %220 = vbcast.lane.b32.xlu0 %v214, %s219
    %v221 = vpop.permute.xlu0 %220
    %v222 = vlaneseq
    %v223 = vshrl.u32 %v222, 7
    %v224 = vsub.s32 0, %v223
    %v225 = vrot.slane %v44, %v224
    %227 = vbcast.lane.b32.xlu0 %v225, 256
    %v228 = vpop.permute.xlu0 %227
    %s230 = sor.u32 256, 8
    %231 = vbcast.lane.b32.xlu0 %v225, %s230
    %v232 = vpop.permute.xlu0 %231
    %v233 = vlaneseq
    %v234 = vshrl.u32 %v233, 7
    %v235 = vsub.s32 1, %v234
    %v236 = vrot.slane %v44, %v235
    %238 = vbcast.lane.b32.xlu0 %v236, 256
    %v239 = vpop.permute.xlu0 %238
    %s241 = sor.u32 256, 8
    %242 = vbcast.lane.b32.xlu0 %v236, %s241
    %v243 = vpop.permute.xlu0 %242
    %v244 = vlaneseq
    %v245 = vshrl.u32 %v244, 7
    %v246 = vsub.s32 2, %v245
    %v247 = vrot.slane %v44, %v246
    %249 = vbcast.lane.b32.xlu0 %v247, 256
    %v250 = vpop.permute.xlu0 %249
    %s252 = sor.u32 256, 8
    %253 = vbcast.lane.b32.xlu0 %v247, %s252
    %v254 = vpop.permute.xlu0 %253
    %v255 = vlaneseq
    %v256 = vshrl.u32 %v255, 7
    %v257 = vsub.s32 3, %v256
    %v258 = vrot.slane %v44, %v257
    %260 = vbcast.lane.b32.xlu0 %v258, 256
    %v261 = vpop.permute.xlu0 %260
    %s263 = sor.u32 256, 8
    %264 = vbcast.lane.b32.xlu0 %v258, %s263
    %v265 = vpop.permute.xlu0 %264
    %v266 = vlaneseq
    %v267 = vshrl.u32 %v266, 7
    %v268 = vsub.s32 4, %v267
    %v269 = vrot.slane %v44, %v268
    %271 = vbcast.lane.b32.xlu0 %v269, 256
    %v272 = vpop.permute.xlu0 %271
    %s274 = sor.u32 256, 8
    %275 = vbcast.lane.b32.xlu0 %v269, %s274
    %v276 = vpop.permute.xlu0 %275
    %v277 = vlaneseq
    %v278 = vshrl.u32 %v277, 7
    %v279 = vsub.s32 5, %v278
    %v280 = vrot.slane %v44, %v279
    %282 = vbcast.lane.b32.xlu0 %v280, 256
    %v283 = vpop.permute.xlu0 %282
    %s285 = sor.u32 256, 8
    %286 = vbcast.lane.b32.xlu0 %v280, %s285
    %v287 = vpop.permute.xlu0 %286
    %v288 = vlaneseq
    %v289 = vshrl.u32 %v288, 7
    %v290 = vsub.s32 6, %v289
    %v291 = vrot.slane %v44, %v290
    %293 = vbcast.lane.b32.xlu0 %v291, 256
    %v294 = vpop.permute.xlu0 %293
    %s296 = sor.u32 256, 8
    %297 = vbcast.lane.b32.xlu0 %v291, %s296
    %v298 = vpop.permute.xlu0 %297
    %v299 = vlaneseq
    %v300 = vshrl.u32 %v299, 7
    %v301 = vsub.s32 7, %v300
    %v302 = vrot.slane %v44, %v301
    %304 = vbcast.lane.b32.xlu0 %v302, 256
    %v305 = vpop.permute.xlu0 %304
    %s307 = sor.u32 256, 8
    %308 = vbcast.lane.b32.xlu0 %v302, %s307
    %v309 = vpop.permute.xlu0 %308
    %v310 = vlaneseq
    %v311 = vshrl.u32 %v310, 7
    %v312 = vsub.s32 0, %v311
    %v313 = vrot.slane %v45, %v312
    %315 = vbcast.lane.b32.xlu0 %v313, 256
    %v316 = vpop.permute.xlu0 %315
    %s318 = sor.u32 256, 8
    %319 = vbcast.lane.b32.xlu0 %v313, %s318
    %v320 = vpop.permute.xlu0 %319
    %v321 = vlaneseq
    %v322 = vshrl.u32 %v321, 7
    %v323 = vsub.s32 1, %v322
    %v324 = vrot.slane %v45, %v323
    %326 = vbcast.lane.b32.xlu0 %v324, 256
    %v327 = vpop.permute.xlu0 %326
    %s329 = sor.u32 256, 8
    %330 = vbcast.lane.b32.xlu0 %v324, %s329
    %v331 = vpop.permute.xlu0 %330
    %v332 = vlaneseq
    %v333 = vshrl.u32 %v332, 7
    %v334 = vsub.s32 2, %v333
    %v335 = vrot.slane %v45, %v334
    %337 = vbcast.lane.b32.xlu0 %v335, 256
    %v338 = vpop.permute.xlu0 %337
    %s340 = sor.u32 256, 8
    %341 = vbcast.lane.b32.xlu0 %v335, %s340
    %v342 = vpop.permute.xlu0 %341
    %v343 = vlaneseq
    %v344 = vshrl.u32 %v343, 7
    %v345 = vsub.s32 3, %v344
    %v346 = vrot.slane %v45, %v345
    %348 = vbcast.lane.b32.xlu0 %v346, 256
    %v349 = vpop.permute.xlu0 %348
    %s351 = sor.u32 256, 8
    %352 = vbcast.lane.b32.xlu0 %v346, %s351
    %v353 = vpop.permute.xlu0 %352
    %v354 = vlaneseq
    %v355 = vshrl.u32 %v354, 7
    %v356 = vsub.s32 4, %v355
    %v357 = vrot.slane %v45, %v356
    %359 = vbcast.lane.b32.xlu0 %v357, 256
    %v360 = vpop.permute.xlu0 %359
    %s362 = sor.u32 256, 8
    %363 = vbcast.lane.b32.xlu0 %v357, %s362
    %v364 = vpop.permute.xlu0 %363
    %v365 = vlaneseq
    %v366 = vshrl.u32 %v365, 7
    %v367 = vsub.s32 5, %v366
    %v368 = vrot.slane %v45, %v367
    %370 = vbcast.lane.b32.xlu0 %v368, 256
    %v371 = vpop.permute.xlu0 %370
    %s373 = sor.u32 256, 8
    %374 = vbcast.lane.b32.xlu0 %v368, %s373
    %v375 = vpop.permute.xlu0 %374
    %v376 = vlaneseq
    %v377 = vshrl.u32 %v376, 7
    %v378 = vsub.s32 6, %v377
    %v379 = vrot.slane %v45, %v378
    %381 = vbcast.lane.b32.xlu0 %v379, 256
    %v382 = vpop.permute.xlu0 %381
    %s384 = sor.u32 256, 8
    %385 = vbcast.lane.b32.xlu0 %v379, %s384
    %v386 = vpop.permute.xlu0 %385
    %v387 = vlaneseq
    %v388 = vshrl.u32 %v387, 7
    %v389 = vsub.s32 7, %v388
    %v390 = vrot.slane %v45, %v389
    %392 = vbcast.lane.b32.xlu0 %v390, 256
    %v393 = vpop.permute.xlu0 %392
    %s395 = sor.u32 256, 8
    %396 = vbcast.lane.b32.xlu0 %v390, %s395
    %v397 = vpop.permute.xlu0 %396
    %v398 = vcombine.low %v52, %v74
    %v399 = vcombine.high %v52, %v74
    %v401 = vunpack.c.l.s4 1983009808
    %v402 = vunpack.c.0.s8 %v401
    %v403 = vlaneseq
    %v404 = vshrl.u32 %v403, 7
    %v405 = vsub.s32 %v402, %v404
    %v406 = vrot.slane %v398, %v405
    %v408 = vunpack.c.l.s4 1983009808
    %v409 = vunpack.c.0.s8 %v408
    %v410 = vlaneseq
    %v411 = vshrl.u32 %v410, 7
    %v412 = vsub.s32 %v409, %v411
    %v413 = vrot.slane %v399, %v412
    %v414 = vcombine.low %v63, %v85
    %v415 = vcombine.high %v63, %v85
    %v417 = vunpack.c.l.s4 1983009808
    %v418 = vunpack.c.0.s8 %v417
    %v419 = vlaneseq
    %v420 = vshrl.u32 %v419, 7
    %v421 = vsub.s32 %v418, %v420
    %v422 = vrot.slane %v414, %v421
    %v424 = vunpack.c.l.s4 1983009808
    %v425 = vunpack.c.0.s8 %v424
    %v426 = vlaneseq
    %v427 = vshrl.u32 %v426, 7
    %v428 = vsub.s32 %v425, %v427
    %v429 = vrot.slane %v415, %v428
    %v430 = vcombine.low %v96, %v118
    %v431 = vcombine.high %v96, %v118
    %v433 = vunpack.c.l.s4 1983009808
    %v434 = vunpack.c.0.s8 %v433
    %v435 = vlaneseq
    %v436 = vshrl.u32 %v435, 7
    %v437 = vsub.s32 %v434, %v436
    %v438 = vrot.slane %v430, %v437
    %v440 = vunpack.c.l.s4 1983009808
    %v441 = vunpack.c.0.s8 %v440
    %v442 = vlaneseq
    %v443 = vshrl.u32 %v442, 7
    %v444 = vsub.s32 %v441, %v443
    %v445 = vrot.slane %v431, %v444
    %v446 = vcombine.low %v107, %v129
    %v447 = vcombine.high %v107, %v129
    %v449 = vunpack.c.l.s4 1983009808
    %v450 = vunpack.c.0.s8 %v449
    %v451 = vlaneseq
    %v452 = vshrl.u32 %v451, 7
    %v453 = vsub.s32 %v450, %v452
    %v454 = vrot.slane %v446, %v453
    %v456 = vunpack.c.l.s4 1983009808
    %v457 = vunpack.c.0.s8 %v456
    %v458 = vlaneseq
    %v459 = vshrl.u32 %v458, 7
    %v460 = vsub.s32 %v457, %v459
    %v461 = vrot.slane %v447, %v460
    %v462 = vcombine.low %v406, %v422
    %v463 = vcombine.high %v406, %v422
    %v465 = vunpack.c.l.s4 1934713408
    %v466 = vunpack.c.0.s8 %v465
    %v467 = vlaneseq
    %v468 = vshrl.u32 %v467, 7
    %v469 = vsub.s32 %v466, %v468
    %v470 = vrot.slane %v462, %v469
    %v472 = vunpack.c.l.s4 1934713408
    %v473 = vunpack.c.0.s8 %v472
    %v474 = vlaneseq
    %v475 = vshrl.u32 %v474, 7
    %v476 = vsub.s32 %v473, %v475
    %v477 = vrot.slane %v463, %v476
    %v478 = vcombine.low %v413, %v429
    %v479 = vcombine.high %v413, %v429
    %v481 = vunpack.c.l.s4 1934713408
    %v482 = vunpack.c.0.s8 %v481
    %v483 = vlaneseq
    %v484 = vshrl.u32 %v483, 7
    %v485 = vsub.s32 %v482, %v484
    %v486 = vrot.slane %v478, %v485
    %v488 = vunpack.c.l.s4 1934713408
    %v489 = vunpack.c.0.s8 %v488
    %v490 = vlaneseq
    %v491 = vshrl.u32 %v490, 7
    %v492 = vsub.s32 %v489, %v491
    %v493 = vrot.slane %v479, %v492
    %v494 = vcombine.low %v438, %v454
    %v495 = vcombine.high %v438, %v454
    %v497 = vunpack.c.l.s4 1934713408
    %v498 = vunpack.c.0.s8 %v497
    %v499 = vlaneseq
    %v500 = vshrl.u32 %v499, 7
    %v501 = vsub.s32 %v498, %v500
    %v502 = vrot.slane %v494, %v501
    %v504 = vunpack.c.l.s4 1934713408
    %v505 = vunpack.c.0.s8 %v504
    %v506 = vlaneseq
    %v507 = vshrl.u32 %v506, 7
    %v508 = vsub.s32 %v505, %v507
    %v509 = vrot.slane %v495, %v508
    %v510 = vcombine.low %v445, %v461
    %v511 = vcombine.high %v445, %v461
    %v513 = vunpack.c.l.s4 1934713408
    %v514 = vunpack.c.0.s8 %v513
    %v515 = vlaneseq
    %v516 = vshrl.u32 %v515, 7
    %v517 = vsub.s32 %v514, %v516
    %v518 = vrot.slane %v510, %v517
    %v520 = vunpack.c.l.s4 1934713408
    %v521 = vunpack.c.0.s8 %v520
    %v522 = vlaneseq
    %v523 = vshrl.u32 %v522, 7
    %v524 = vsub.s32 %v521, %v523
    %v525 = vrot.slane %v511, %v524
    %v526 = vcombine.low %v470, %v502
    %v527 = vcombine.high %v470, %v502
    %v528 = vcombine.low %v477, %v509
    %v529 = vcombine.high %v477, %v509
    %v530 = vcombine.low %v486, %v518
    %v531 = vcombine.high %v486, %v518
    %v532 = vcombine.low %v493, %v525
    %v533 = vcombine.high %v493, %v525
    %v534 = vcombine.low %v140, %v162
    %v535 = vcombine.high %v140, %v162
    %v537 = vunpack.c.l.s4 1983009808
    %v538 = vunpack.c.0.s8 %v537
    %v539 = vlaneseq
    %v540 = vshrl.u32 %v539, 7
    %v541 = vsub.s32 %v538, %v540
    %v542 = vrot.slane %v534, %v541
    %v544 = vunpack.c.l.s4 1983009808
    %v545 = vunpack.c.0.s8 %v544
    %v546 = vlaneseq
    %v547 = vshrl.u32 %v546, 7
    %v548 = vsub.s32 %v545, %v547
    %v549 = vrot.slane %v535, %v548
    %v550 = vcombine.low %v151, %v173
    %v551 = vcombine.high %v151, %v173
    %v553 = vunpack.c.l.s4 1983009808
    %v554 = vunpack.c.0.s8 %v553
    %v555 = vlaneseq
    %v556 = vshrl.u32 %v555, 7
    %v557 = vsub.s32 %v554, %v556
    %v558 = vrot.slane %v550, %v557
    %v560 = vunpack.c.l.s4 1983009808
    %v561 = vunpack.c.0.s8 %v560
    %v562 = vlaneseq
    %v563 = vshrl.u32 %v562, 7
    %v564 = vsub.s32 %v561, %v563
    %v565 = vrot.slane %v551, %v564
    %v566 = vcombine.low %v184, %v206
    %v567 = vcombine.high %v184, %v206
    %v569 = vunpack.c.l.s4 1983009808
    %v570 = vunpack.c.0.s8 %v569
    %v571 = vlaneseq
    %v572 = vshrl.u32 %v571, 7
    %v573 = vsub.s32 %v570, %v572
    %v574 = vrot.slane %v566, %v573
    %v576 = vunpack.c.l.s4 1983009808
    %v577 = vunpack.c.0.s8 %v576
    %v578 = vlaneseq
    %v579 = vshrl.u32 %v578, 7
    %v580 = vsub.s32 %v577, %v579
    %v581 = vrot.slane %v567, %v580
    %v582 = vcombine.low %v195, %v217
    %v583 = vcombine.high %v195, %v217
    %v585 = vunpack.c.l.s4 1983009808
    %v586 = vunpack.c.0.s8 %v585
    %v587 = vlaneseq
    %v588 = vshrl.u32 %v587, 7
    %v589 = vsub.s32 %v586, %v588
    %v590 = vrot.slane %v582, %v589
    %v592 = vunpack.c.l.s4 1983009808
    %v593 = vunpack.c.0.s8 %v592
    %v594 = vlaneseq
    %v595 = vshrl.u32 %v594, 7
    %v596 = vsub.s32 %v593, %v595
    %v597 = vrot.slane %v583, %v596
    %v598 = vcombine.low %v542, %v558
    %v599 = vcombine.high %v542, %v558
    %v601 = vunpack.c.l.s4 1934713408
    %v602 = vunpack.c.0.s8 %v601
    %v603 = vlaneseq
    %v604 = vshrl.u32 %v603, 7
    %v605 = vsub.s32 %v602, %v604
    %v606 = vrot.slane %v598, %v605
    %v608 = vunpack.c.l.s4 1934713408
    %v609 = vunpack.c.0.s8 %v608
    %v610 = vlaneseq
    %v611 = vshrl.u32 %v610, 7
    %v612 = vsub.s32 %v609, %v611
    %v613 = vrot.slane %v599, %v612
    %v614 = vcombine.low %v549, %v565
    %v615 = vcombine.high %v549, %v565
    %v617 = vunpack.c.l.s4 1934713408
    %v618 = vunpack.c.0.s8 %v617
    %v619 = vlaneseq
    %v620 = vshrl.u32 %v619, 7
    %v621 = vsub.s32 %v618, %v620
    %v622 = vrot.slane %v614, %v621
    %v624 = vunpack.c.l.s4 1934713408
    %v625 = vunpack.c.0.s8 %v624
    %v626 = vlaneseq
    %v627 = vshrl.u32 %v626, 7
    %v628 = vsub.s32 %v625, %v627
    %v629 = vrot.slane %v615, %v628
    %v630 = vcombine.low %v574, %v590
    %v631 = vcombine.high %v574, %v590
    %v633 = vunpack.c.l.s4 1934713408
    %v634 = vunpack.c.0.s8 %v633
    %v635 = vlaneseq
    %v636 = vshrl.u32 %v635, 7
    %v637 = vsub.s32 %v634, %v636
    %v638 = vrot.slane %v630, %v637
    %v640 = vunpack.c.l.s4 1934713408
    %v641 = vunpack.c.0.s8 %v640
    %v642 = vlaneseq
    %v643 = vshrl.u32 %v642, 7
    %v644 = vsub.s32 %v641, %v643
    %v645 = vrot.slane %v631, %v644
    %v646 = vcombine.low %v581, %v597
    %v647 = vcombine.high %v581, %v597
    %v649 = vunpack.c.l.s4 1934713408
    %v650 = vunpack.c.0.s8 %v649
    %v651 = vlaneseq
    %v652 = vshrl.u32 %v651, 7
    %v653 = vsub.s32 %v650, %v652
    %v654 = vrot.slane %v646, %v653
    %v656 = vunpack.c.l.s4 1934713408
    %v657 = vunpack.c.0.s8 %v656
    %v658 = vlaneseq
    %v659 = vshrl.u32 %v658, 7
    %v660 = vsub.s32 %v657, %v659
    %v661 = vrot.slane %v647, %v660
    %v662 = vcombine.low %v606, %v638
    %v663 = vcombine.high %v606, %v638
    %v664 = vcombine.low %v613, %v645
    %v665 = vcombine.high %v613, %v645
    %v666 = vcombine.low %v622, %v654
    %v667 = vcombine.high %v622, %v654
    %v668 = vcombine.low %v629, %v661
    %v669 = vcombine.high %v629, %v661
    %v670 = vcombine.low %v228, %v250
    %v671 = vcombine.high %v228, %v250
    %v673 = vunpack.c.l.s4 1983009808
    %v674 = vunpack.c.0.s8 %v673
    %v675 = vlaneseq
    %v676 = vshrl.u32 %v675, 7
    %v677 = vsub.s32 %v674, %v676
    %v678 = vrot.slane %v670, %v677
    %v680 = vunpack.c.l.s4 1983009808
    %v681 = vunpack.c.0.s8 %v680
    %v682 = vlaneseq
    %v683 = vshrl.u32 %v682, 7
    %v684 = vsub.s32 %v681, %v683
    %v685 = vrot.slane %v671, %v684
    %v686 = vcombine.low %v239, %v261
    %v687 = vcombine.high %v239, %v261
    %v689 = vunpack.c.l.s4 1983009808
    %v690 = vunpack.c.0.s8 %v689
    %v691 = vlaneseq
    %v692 = vshrl.u32 %v691, 7
    %v693 = vsub.s32 %v690, %v692
    %v694 = vrot.slane %v686, %v693
    %v696 = vunpack.c.l.s4 1983009808
    %v697 = vunpack.c.0.s8 %v696
    %v698 = vlaneseq
    %v699 = vshrl.u32 %v698, 7
    %v700 = vsub.s32 %v697, %v699
    %v701 = vrot.slane %v687, %v700
    %v702 = vcombine.low %v272, %v294
    %v703 = vcombine.high %v272, %v294
    %v705 = vunpack.c.l.s4 1983009808
    %v706 = vunpack.c.0.s8 %v705
    %v707 = vlaneseq
    %v708 = vshrl.u32 %v707, 7
    %v709 = vsub.s32 %v706, %v708
    %v710 = vrot.slane %v702, %v709
    %v712 = vunpack.c.l.s4 1983009808
    %v713 = vunpack.c.0.s8 %v712
    %v714 = vlaneseq
    %v715 = vshrl.u32 %v714, 7
    %v716 = vsub.s32 %v713, %v715
    %v717 = vrot.slane %v703, %v716
    %v718 = vcombine.low %v283, %v305
    %v719 = vcombine.high %v283, %v305
    %v721 = vunpack.c.l.s4 1983009808
    %v722 = vunpack.c.0.s8 %v721
    %v723 = vlaneseq
    %v724 = vshrl.u32 %v723, 7
    %v725 = vsub.s32 %v722, %v724
    %v726 = vrot.slane %v718, %v725
    %v728 = vunpack.c.l.s4 1983009808
    %v729 = vunpack.c.0.s8 %v728
    %v730 = vlaneseq
    %v731 = vshrl.u32 %v730, 7
    %v732 = vsub.s32 %v729, %v731
    %v733 = vrot.slane %v719, %v732
    %v734 = vcombine.low %v678, %v694
    %v735 = vcombine.high %v678, %v694
    %v737 = vunpack.c.l.s4 1934713408
    %v738 = vunpack.c.0.s8 %v737
    %v739 = vlaneseq
    %v740 = vshrl.u32 %v739, 7
    %v741 = vsub.s32 %v738, %v740
    %v742 = vrot.slane %v734, %v741
    %v744 = vunpack.c.l.s4 1934713408
    %v745 = vunpack.c.0.s8 %v744
    %v746 = vlaneseq
    %v747 = vshrl.u32 %v746, 7
    %v748 = vsub.s32 %v745, %v747
    %v749 = vrot.slane %v735, %v748
    %v750 = vcombine.low %v685, %v701
    %v751 = vcombine.high %v685, %v701
    %v753 = vunpack.c.l.s4 1934713408
    %v754 = vunpack.c.0.s8 %v753
    %v755 = vlaneseq
    %v756 = vshrl.u32 %v755, 7
    %v757 = vsub.s32 %v754, %v756
    %v758 = vrot.slane %v750, %v757
    %v760 = vunpack.c.l.s4 1934713408
    %v761 = vunpack.c.0.s8 %v760
    %v762 = vlaneseq
    %v763 = vshrl.u32 %v762, 7
    %v764 = vsub.s32 %v761, %v763
    %v765 = vrot.slane %v751, %v764
    %v766 = vcombine.low %v710, %v726
    %v767 = vcombine.high %v710, %v726
    %v769 = vunpack.c.l.s4 1934713408
    %v770 = vunpack.c.0.s8 %v769
    %v771 = vlaneseq
    %v772 = vshrl.u32 %v771, 7
    %v773 = vsub.s32 %v770, %v772
    %v774 = vrot.slane %v766, %v773
    %v776 = vunpack.c.l.s4 1934713408
    %v777 = vunpack.c.0.s8 %v776
    %v778 = vlaneseq
    %v779 = vshrl.u32 %v778, 7
    %v780 = vsub.s32 %v777, %v779
    %v781 = vrot.slane %v767, %v780
    %v782 = vcombine.low %v717, %v733
    %v783 = vcombine.high %v717, %v733
    %v785 = vunpack.c.l.s4 1934713408
    %v786 = vunpack.c.0.s8 %v785
    %v787 = vlaneseq
    %v788 = vshrl.u32 %v787, 7
    %v789 = vsub.s32 %v786, %v788
    %v790 = vrot.slane %v782, %v789
    %v792 = vunpack.c.l.s4 1934713408
    %v793 = vunpack.c.0.s8 %v792
    %v794 = vlaneseq
    %v795 = vshrl.u32 %v794, 7
    %v796 = vsub.s32 %v793, %v795
    %v797 = vrot.slane %v783, %v796
    %v798 = vcombine.low %v742, %v774
    %v799 = vcombine.high %v742, %v774
    %v800 = vcombine.low %v749, %v781
    %v801 = vcombine.high %v749, %v781
    %v802 = vcombine.low %v758, %v790
    %v803 = vcombine.high %v758, %v790
    %v804 = vcombine.low %v765, %v797
    %v805 = vcombine.high %v765, %v797
    %v806 = vcombine.low %v316, %v338
    %v807 = vcombine.high %v316, %v338
    %v809 = vunpack.c.l.s4 1983009808
    %v810 = vunpack.c.0.s8 %v809
    %v811 = vlaneseq
    %v812 = vshrl.u32 %v811, 7
    %v813 = vsub.s32 %v810, %v812
    %v814 = vrot.slane %v806, %v813
    %v816 = vunpack.c.l.s4 1983009808
    %v817 = vunpack.c.0.s8 %v816
    %v818 = vlaneseq
    %v819 = vshrl.u32 %v818, 7
    %v820 = vsub.s32 %v817, %v819
    %v821 = vrot.slane %v807, %v820
    %v822 = vcombine.low %v327, %v349
    %v823 = vcombine.high %v327, %v349
    %v825 = vunpack.c.l.s4 1983009808
    %v826 = vunpack.c.0.s8 %v825
    %v827 = vlaneseq
    %v828 = vshrl.u32 %v827, 7
    %v829 = vsub.s32 %v826, %v828
    %v830 = vrot.slane %v822, %v829
    %v832 = vunpack.c.l.s4 1983009808
    %v833 = vunpack.c.0.s8 %v832
    %v834 = vlaneseq
    %v835 = vshrl.u32 %v834, 7
    %v836 = vsub.s32 %v833, %v835
    %v837 = vrot.slane %v823, %v836
    %v838 = vcombine.low %v360, %v382
    %v839 = vcombine.high %v360, %v382
    %v841 = vunpack.c.l.s4 1983009808
    %v842 = vunpack.c.0.s8 %v841
    %v843 = vlaneseq
    %v844 = vshrl.u32 %v843, 7
    %v845 = vsub.s32 %v842, %v844
    %v846 = vrot.slane %v838, %v845
    %v848 = vunpack.c.l.s4 1983009808
    %v849 = vunpack.c.0.s8 %v848
    %v850 = vlaneseq
    %v851 = vshrl.u32 %v850, 7
    %v852 = vsub.s32 %v849, %v851
    %v853 = vrot.slane %v839, %v852
    %v854 = vcombine.low %v371, %v393
    %v855 = vcombine.high %v371, %v393
    %v857 = vunpack.c.l.s4 1983009808
    %v858 = vunpack.c.0.s8 %v857
    %v859 = vlaneseq
    %v860 = vshrl.u32 %v859, 7
    %v861 = vsub.s32 %v858, %v860
    %v862 = vrot.slane %v854, %v861
    %v864 = vunpack.c.l.s4 1983009808
    %v865 = vunpack.c.0.s8 %v864
    %v866 = vlaneseq
    %v867 = vshrl.u32 %v866, 7
    %v868 = vsub.s32 %v865, %v867
    %v869 = vrot.slane %v855, %v868
    %v870 = vcombine.low %v814, %v830
    %v871 = vcombine.high %v814, %v830
    %v873 = vunpack.c.l.s4 1934713408
    %v874 = vunpack.c.0.s8 %v873
    %v875 = vlaneseq
    %v876 = vshrl.u32 %v875, 7
    %v877 = vsub.s32 %v874, %v876
    %v878 = vrot.slane %v870, %v877
    %v880 = vunpack.c.l.s4 1934713408
    %v881 = vunpack.c.0.s8 %v880
    %v882 = vlaneseq
    %v883 = vshrl.u32 %v882, 7
    %v884 = vsub.s32 %v881, %v883
    %v885 = vrot.slane %v871, %v884
    %v886 = vcombine.low %v821, %v837
    %v887 = vcombine.high %v821, %v837
    %v889 = vunpack.c.l.s4 1934713408
    %v890 = vunpack.c.0.s8 %v889
    %v891 = vlaneseq
    %v892 = vshrl.u32 %v891, 7
    %v893 = vsub.s32 %v890, %v892
    %v894 = vrot.slane %v886, %v893
    %v896 = vunpack.c.l.s4 1934713408
    %v897 = vunpack.c.0.s8 %v896
    %v898 = vlaneseq
    %v899 = vshrl.u32 %v898, 7
    %v900 = vsub.s32 %v897, %v899
    %v901 = vrot.slane %v887, %v900
    %v902 = vcombine.low %v846, %v862
    %v903 = vcombine.high %v846, %v862
    %v905 = vunpack.c.l.s4 1934713408
    %v906 = vunpack.c.0.s8 %v905
    %v907 = vlaneseq
    %v908 = vshrl.u32 %v907, 7
    %v909 = vsub.s32 %v906, %v908
    %v910 = vrot.slane %v902, %v909
    %v912 = vunpack.c.l.s4 1934713408
    %v913 = vunpack.c.0.s8 %v912
    %v914 = vlaneseq
    %v915 = vshrl.u32 %v914, 7
    %v916 = vsub.s32 %v913, %v915
    %v917 = vrot.slane %v903, %v916
    %v918 = vcombine.low %v853, %v869
    %v919 = vcombine.high %v853, %v869
    %v921 = vunpack.c.l.s4 1934713408
    %v922 = vunpack.c.0.s8 %v921
    %v923 = vlaneseq
    %v924 = vshrl.u32 %v923, 7
    %v925 = vsub.s32 %v922, %v924
    %v926 = vrot.slane %v918, %v925
    %v928 = vunpack.c.l.s4 1934713408
    %v929 = vunpack.c.0.s8 %v928
    %v930 = vlaneseq
    %v931 = vshrl.u32 %v930, 7
    %v932 = vsub.s32 %v929, %v931
    %v933 = vrot.slane %v919, %v932
    %v934 = vcombine.low %v878, %v910
    %v935 = vcombine.high %v878, %v910
    %v936 = vcombine.low %v885, %v917
    %v937 = vcombine.high %v885, %v917
    %v938 = vcombine.low %v894, %v926
    %v939 = vcombine.high %v894, %v926
    %v940 = vcombine.low %v901, %v933
    %v941 = vcombine.high %v901, %v933
    %v942 = vcombine.low %v56, %v78
    %v943 = vcombine.high %v56, %v78
    %v945 = vunpack.c.l.s4 1983009808
    %v946 = vunpack.c.0.s8 %v945
    %v947 = vlaneseq
    %v948 = vshrl.u32 %v947, 7
    %v949 = vsub.s32 %v946, %v948
    %v950 = vrot.slane %v942, %v949
    %v952 = vunpack.c.l.s4 1983009808
    %v953 = vunpack.c.0.s8 %v952
    %v954 = vlaneseq
    %v955 = vshrl.u32 %v954, 7
    %v956 = vsub.s32 %v953, %v955
    %v957 = vrot.slane %v943, %v956
    %v958 = vcombine.low %v67, %v89
    %v959 = vcombine.high %v67, %v89
    %v961 = vunpack.c.l.s4 1983009808
    %v962 = vunpack.c.0.s8 %v961
    %v963 = vlaneseq
    %v964 = vshrl.u32 %v963, 7
    %v965 = vsub.s32 %v962, %v964
    %v966 = vrot.slane %v958, %v965
    %v968 = vunpack.c.l.s4 1983009808
    %v969 = vunpack.c.0.s8 %v968
    %v970 = vlaneseq
    %v971 = vshrl.u32 %v970, 7
    %v972 = vsub.s32 %v969, %v971
    %v973 = vrot.slane %v959, %v972
    %v974 = vcombine.low %v100, %v122
    %v975 = vcombine.high %v100, %v122
    %v977 = vunpack.c.l.s4 1983009808
    %v978 = vunpack.c.0.s8 %v977
    %v979 = vlaneseq
    %v980 = vshrl.u32 %v979, 7
    %v981 = vsub.s32 %v978, %v980
    %v982 = vrot.slane %v974, %v981
    %v984 = vunpack.c.l.s4 1983009808
    %v985 = vunpack.c.0.s8 %v984
    %v986 = vlaneseq
    %v987 = vshrl.u32 %v986, 7
    %v988 = vsub.s32 %v985, %v987
    %v989 = vrot.slane %v975, %v988
    %v990 = vcombine.low %v111, %v133
    %v991 = vcombine.high %v111, %v133
    %v993 = vunpack.c.l.s4 1983009808
    %v994 = vunpack.c.0.s8 %v993
    %v995 = vlaneseq
    %v996 = vshrl.u32 %v995, 7
    %v997 = vsub.s32 %v994, %v996
    %v998 = vrot.slane %v990, %v997
    %v1000 = vunpack.c.l.s4 1983009808
    %v1001 = vunpack.c.0.s8 %v1000
    %v1002 = vlaneseq
    %v1003 = vshrl.u32 %v1002, 7
    %v1004 = vsub.s32 %v1001, %v1003
    %v1005 = vrot.slane %v991, %v1004
    %v1006 = vcombine.low %v950, %v966
    %v1007 = vcombine.high %v950, %v966
    %v1009 = vunpack.c.l.s4 1934713408
    %v1010 = vunpack.c.0.s8 %v1009
    %v1011 = vlaneseq
    %v1012 = vshrl.u32 %v1011, 7
    %v1013 = vsub.s32 %v1010, %v1012
    %v1014 = vrot.slane %v1006, %v1013
    %v1016 = vunpack.c.l.s4 1934713408
    %v1017 = vunpack.c.0.s8 %v1016
    %v1018 = vlaneseq
    %v1019 = vshrl.u32 %v1018, 7
    %v1020 = vsub.s32 %v1017, %v1019
    %v1021 = vrot.slane %v1007, %v1020
    %v1022 = vcombine.low %v957, %v973
    %v1023 = vcombine.high %v957, %v973
    %v1025 = vunpack.c.l.s4 1934713408
    %v1026 = vunpack.c.0.s8 %v1025
    %v1027 = vlaneseq
    %v1028 = vshrl.u32 %v1027, 7
    %v1029 = vsub.s32 %v1026, %v1028
    %v1030 = vrot.slane %v1022, %v1029
    %v1032 = vunpack.c.l.s4 1934713408
    %v1033 = vunpack.c.0.s8 %v1032
    %v1034 = vlaneseq
    %v1035 = vshrl.u32 %v1034, 7
    %v1036 = vsub.s32 %v1033, %v1035
    %v1037 = vrot.slane %v1023, %v1036
    %v1038 = vcombine.low %v982, %v998
    %v1039 = vcombine.high %v982, %v998
    %v1041 = vunpack.c.l.s4 1934713408
    %v1042 = vunpack.c.0.s8 %v1041
    %v1043 = vlaneseq
    %v1044 = vshrl.u32 %v1043, 7
    %v1045 = vsub.s32 %v1042, %v1044
    %v1046 = vrot.slane %v1038, %v1045
    %v1048 = vunpack.c.l.s4 1934713408
    %v1049 = vunpack.c.0.s8 %v1048
    %v1050 = vlaneseq
    %v1051 = vshrl.u32 %v1050, 7
    %v1052 = vsub.s32 %v1049, %v1051
    %v1053 = vrot.slane %v1039, %v1052
    %v1054 = vcombine.low %v989, %v1005
    %v1055 = vcombine.high %v989, %v1005
    %v1057 = vunpack.c.l.s4 1934713408
    %v1058 = vunpack.c.0.s8 %v1057
    %v1059 = vlaneseq
    %v1060 = vshrl.u32 %v1059, 7
    %v1061 = vsub.s32 %v1058, %v1060
    %v1062 = vrot.slane %v1054, %v1061
    %v1064 = vunpack.c.l.s4 1934713408
    %v1065 = vunpack.c.0.s8 %v1064
    %v1066 = vlaneseq
    %v1067 = vshrl.u32 %v1066, 7
    %v1068 = vsub.s32 %v1065, %v1067
    %v1069 = vrot.slane %v1055, %v1068
    %v1070 = vcombine.low %v1014, %v1046
    %v1071 = vcombine.high %v1014, %v1046
    %v1072 = vcombine.low %v1021, %v1053
    %v1073 = vcombine.high %v1021, %v1053
    %v1074 = vcombine.low %v1030, %v1062
    %v1075 = vcombine.high %v1030, %v1062
    %v1076 = vcombine.low %v1037, %v1069
    %v1077 = vcombine.high %v1037, %v1069
    %v1078 = vcombine.low %v144, %v166
    %v1079 = vcombine.high %v144, %v166
    %v1081 = vunpack.c.l.s4 1983009808
    %v1082 = vunpack.c.0.s8 %v1081
    %v1083 = vlaneseq
    %v1084 = vshrl.u32 %v1083, 7
    %v1085 = vsub.s32 %v1082, %v1084
    %v1086 = vrot.slane %v1078, %v1085
    %v1088 = vunpack.c.l.s4 1983009808
    %v1089 = vunpack.c.0.s8 %v1088
    %v1090 = vlaneseq
    %v1091 = vshrl.u32 %v1090, 7
    %v1092 = vsub.s32 %v1089, %v1091
    %v1093 = vrot.slane %v1079, %v1092
    %v1094 = vcombine.low %v155, %v177
    %v1095 = vcombine.high %v155, %v177
    %v1097 = vunpack.c.l.s4 1983009808
    %v1098 = vunpack.c.0.s8 %v1097
    %v1099 = vlaneseq
    %v1100 = vshrl.u32 %v1099, 7
    %v1101 = vsub.s32 %v1098, %v1100
    %v1102 = vrot.slane %v1094, %v1101
    %v1104 = vunpack.c.l.s4 1983009808
    %v1105 = vunpack.c.0.s8 %v1104
    %v1106 = vlaneseq
    %v1107 = vshrl.u32 %v1106, 7
    %v1108 = vsub.s32 %v1105, %v1107
    %v1109 = vrot.slane %v1095, %v1108
    %v1110 = vcombine.low %v188, %v210
    %v1111 = vcombine.high %v188, %v210
    %v1113 = vunpack.c.l.s4 1983009808
    %v1114 = vunpack.c.0.s8 %v1113
    %v1115 = vlaneseq
    %v1116 = vshrl.u32 %v1115, 7
    %v1117 = vsub.s32 %v1114, %v1116
    %v1118 = vrot.slane %v1110, %v1117
    %v1120 = vunpack.c.l.s4 1983009808
    %v1121 = vunpack.c.0.s8 %v1120
    %v1122 = vlaneseq
    %v1123 = vshrl.u32 %v1122, 7
    %v1124 = vsub.s32 %v1121, %v1123
    %v1125 = vrot.slane %v1111, %v1124
    %v1126 = vcombine.low %v199, %v221
    %v1127 = vcombine.high %v199, %v221
    %v1129 = vunpack.c.l.s4 1983009808
    %v1130 = vunpack.c.0.s8 %v1129
    %v1131 = vlaneseq
    %v1132 = vshrl.u32 %v1131, 7
    %v1133 = vsub.s32 %v1130, %v1132
    %v1134 = vrot.slane %v1126, %v1133
    %v1136 = vunpack.c.l.s4 1983009808
    %v1137 = vunpack.c.0.s8 %v1136
    %v1138 = vlaneseq
    %v1139 = vshrl.u32 %v1138, 7
    %v1140 = vsub.s32 %v1137, %v1139
    %v1141 = vrot.slane %v1127, %v1140
    %v1142 = vcombine.low %v1086, %v1102
    %v1143 = vcombine.high %v1086, %v1102
    %v1145 = vunpack.c.l.s4 1934713408
    %v1146 = vunpack.c.0.s8 %v1145
    %v1147 = vlaneseq
    %v1148 = vshrl.u32 %v1147, 7
    %v1149 = vsub.s32 %v1146, %v1148
    %v1150 = vrot.slane %v1142, %v1149
    %v1152 = vunpack.c.l.s4 1934713408
    %v1153 = vunpack.c.0.s8 %v1152
    %v1154 = vlaneseq
    %v1155 = vshrl.u32 %v1154, 7
    %v1156 = vsub.s32 %v1153, %v1155
    %v1157 = vrot.slane %v1143, %v1156
    %v1158 = vcombine.low %v1093, %v1109
    %v1159 = vcombine.high %v1093, %v1109
    %v1161 = vunpack.c.l.s4 1934713408
    %v1162 = vunpack.c.0.s8 %v1161
    %v1163 = vlaneseq
    %v1164 = vshrl.u32 %v1163, 7
    %v1165 = vsub.s32 %v1162, %v1164
    %v1166 = vrot.slane %v1158, %v1165
    %v1168 = vunpack.c.l.s4 1934713408
    %v1169 = vunpack.c.0.s8 %v1168
    %v1170 = vlaneseq
    %v1171 = vshrl.u32 %v1170, 7
    %v1172 = vsub.s32 %v1169, %v1171
    %v1173 = vrot.slane %v1159, %v1172
    %v1174 = vcombine.low %v1118, %v1134
    %v1175 = vcombine.high %v1118, %v1134
    %v1177 = vunpack.c.l.s4 1934713408
    %v1178 = vunpack.c.0.s8 %v1177
    %v1179 = vlaneseq
    %v1180 = vshrl.u32 %v1179, 7
    %v1181 = vsub.s32 %v1178, %v1180
    %v1182 = vrot.slane %v1174, %v1181
    %v1184 = vunpack.c.l.s4 1934713408
    %v1185 = vunpack.c.0.s8 %v1184
    %v1186 = vlaneseq
    %v1187 = vshrl.u32 %v1186, 7
    %v1188 = vsub.s32 %v1185, %v1187
    %v1189 = vrot.slane %v1175, %v1188
    %v1190 = vcombine.low %v1125, %v1141
    %v1191 = vcombine.high %v1125, %v1141
    %v1193 = vunpack.c.l.s4 1934713408
    %v1194 = vunpack.c.0.s8 %v1193
    %v1195 = vlaneseq
    %v1196 = vshrl.u32 %v1195, 7
    %v1197 = vsub.s32 %v1194, %v1196
    %v1198 = vrot.slane %v1190, %v1197
    %v1200 = vunpack.c.l.s4 1934713408
    %v1201 = vunpack.c.0.s8 %v1200
    %v1202 = vlaneseq
    %v1203 = vshrl.u32 %v1202, 7
    %v1204 = vsub.s32 %v1201, %v1203
    %v1205 = vrot.slane %v1191, %v1204
    %v1206 = vcombine.low %v1150, %v1182
    %v1207 = vcombine.high %v1150, %v1182
    %v1208 = vcombine.low %v1157, %v1189
    %v1209 = vcombine.high %v1157, %v1189
    %v1210 = vcombine.low %v1166, %v1198
    %v1211 = vcombine.high %v1166, %v1198
    %v1212 = vcombine.low %v1173, %v1205
    %v1213 = vcombine.high %v1173, %v1205
    %v1214 = vcombine.low %v232, %v254
    %v1215 = vcombine.high %v232, %v254
    %v1217 = vunpack.c.l.s4 1983009808
    %v1218 = vunpack.c.0.s8 %v1217
    %v1219 = vlaneseq
    %v1220 = vshrl.u32 %v1219, 7
    %v1221 = vsub.s32 %v1218, %v1220
    %v1222 = vrot.slane %v1214, %v1221
    %v1224 = vunpack.c.l.s4 1983009808
    %v1225 = vunpack.c.0.s8 %v1224
    %v1226 = vlaneseq
    %v1227 = vshrl.u32 %v1226, 7
    %v1228 = vsub.s32 %v1225, %v1227
    %v1229 = vrot.slane %v1215, %v1228
    %v1230 = vcombine.low %v243, %v265
    %v1231 = vcombine.high %v243, %v265
    %v1233 = vunpack.c.l.s4 1983009808
    %v1234 = vunpack.c.0.s8 %v1233
    %v1235 = vlaneseq
    %v1236 = vshrl.u32 %v1235, 7
    %v1237 = vsub.s32 %v1234, %v1236
    %v1238 = vrot.slane %v1230, %v1237
    %v1240 = vunpack.c.l.s4 1983009808
    %v1241 = vunpack.c.0.s8 %v1240
    %v1242 = vlaneseq
    %v1243 = vshrl.u32 %v1242, 7
    %v1244 = vsub.s32 %v1241, %v1243
    %v1245 = vrot.slane %v1231, %v1244
    %v1246 = vcombine.low %v276, %v298
    %v1247 = vcombine.high %v276, %v298
    %v1249 = vunpack.c.l.s4 1983009808
    %v1250 = vunpack.c.0.s8 %v1249
    %v1251 = vlaneseq
    %v1252 = vshrl.u32 %v1251, 7
    %v1253 = vsub.s32 %v1250, %v1252
    %v1254 = vrot.slane %v1246, %v1253
    %v1256 = vunpack.c.l.s4 1983009808
    %v1257 = vunpack.c.0.s8 %v1256
    %v1258 = vlaneseq
    %v1259 = vshrl.u32 %v1258, 7
    %v1260 = vsub.s32 %v1257, %v1259
    %v1261 = vrot.slane %v1247, %v1260
    %v1262 = vcombine.low %v287, %v309
    %v1263 = vcombine.high %v287, %v309
    %v1265 = vunpack.c.l.s4 1983009808
    %v1266 = vunpack.c.0.s8 %v1265
    %v1267 = vlaneseq
    %v1268 = vshrl.u32 %v1267, 7
    %v1269 = vsub.s32 %v1266, %v1268
    %v1270 = vrot.slane %v1262, %v1269
    %v1272 = vunpack.c.l.s4 1983009808
    %v1273 = vunpack.c.0.s8 %v1272
    %v1274 = vlaneseq
    %v1275 = vshrl.u32 %v1274, 7
    %v1276 = vsub.s32 %v1273, %v1275
    %v1277 = vrot.slane %v1263, %v1276
    %v1278 = vcombine.low %v1222, %v1238
    %v1279 = vcombine.high %v1222, %v1238
    %v1281 = vunpack.c.l.s4 1934713408
    %v1282 = vunpack.c.0.s8 %v1281
    %v1283 = vlaneseq
    %v1284 = vshrl.u32 %v1283, 7
    %v1285 = vsub.s32 %v1282, %v1284
    %v1286 = vrot.slane %v1278, %v1285
    %v1288 = vunpack.c.l.s4 1934713408
    %v1289 = vunpack.c.0.s8 %v1288
    %v1290 = vlaneseq
    %v1291 = vshrl.u32 %v1290, 7
    %v1292 = vsub.s32 %v1289, %v1291
    %v1293 = vrot.slane %v1279, %v1292
    %v1294 = vcombine.low %v1229, %v1245
    %v1295 = vcombine.high %v1229, %v1245
    %v1297 = vunpack.c.l.s4 1934713408
    %v1298 = vunpack.c.0.s8 %v1297
    %v1299 = vlaneseq
    %v1300 = vshrl.u32 %v1299, 7
    %v1301 = vsub.s32 %v1298, %v1300
    %v1302 = vrot.slane %v1294, %v1301
    %v1304 = vunpack.c.l.s4 1934713408
    %v1305 = vunpack.c.0.s8 %v1304
    %v1306 = vlaneseq
    %v1307 = vshrl.u32 %v1306, 7
    %v1308 = vsub.s32 %v1305, %v1307
    %v1309 = vrot.slane %v1295, %v1308
    %v1310 = vcombine.low %v1254, %v1270
    %v1311 = vcombine.high %v1254, %v1270
    %v1313 = vunpack.c.l.s4 1934713408
    %v1314 = vunpack.c.0.s8 %v1313
    %v1315 = vlaneseq
    %v1316 = vshrl.u32 %v1315, 7
    %v1317 = vsub.s32 %v1314, %v1316
    %v1318 = vrot.slane %v1310, %v1317
    %v1320 = vunpack.c.l.s4 1934713408
    %v1321 = vunpack.c.0.s8 %v1320
    %v1322 = vlaneseq
    %v1323 = vshrl.u32 %v1322, 7
    %v1324 = vsub.s32 %v1321, %v1323
    %v1325 = vrot.slane %v1311, %v1324
    %v1326 = vcombine.low %v1261, %v1277
    %v1327 = vcombine.high %v1261, %v1277
    %v1329 = vunpack.c.l.s4 1934713408
    %v1330 = vunpack.c.0.s8 %v1329
    %v1331 = vlaneseq
    %v1332 = vshrl.u32 %v1331, 7
    %v1333 = vsub.s32 %v1330, %v1332
    %v1334 = vrot.slane %v1326, %v1333
    %v1336 = vunpack.c.l.s4 1934713408
    %v1337 = vunpack.c.0.s8 %v1336
    %v1338 = vlaneseq
    %v1339 = vshrl.u32 %v1338, 7
    %v1340 = vsub.s32 %v1337, %v1339
    %v1341 = vrot.slane %v1327, %v1340
    %v1342 = vcombine.low %v1286, %v1318
    %v1343 = vcombine.high %v1286, %v1318
    %v1344 = vcombine.low %v1293, %v1325
    %v1345 = vcombine.high %v1293, %v1325
    %v1346 = vcombine.low %v1302, %v1334
    %v1347 = vcombine.high %v1302, %v1334
    %v1348 = vcombine.low %v1309, %v1341
    %v1349 = vcombine.high %v1309, %v1341
    %v1350 = vcombine.low %v320, %v342
    %v1351 = vcombine.high %v320, %v342
    %v1353 = vunpack.c.l.s4 1983009808
    %v1354 = vunpack.c.0.s8 %v1353
    %v1355 = vlaneseq
    %v1356 = vshrl.u32 %v1355, 7
    %v1357 = vsub.s32 %v1354, %v1356
    %v1358 = vrot.slane %v1350, %v1357
    %v1360 = vunpack.c.l.s4 1983009808
    %v1361 = vunpack.c.0.s8 %v1360
    %v1362 = vlaneseq
    %v1363 = vshrl.u32 %v1362, 7
    %v1364 = vsub.s32 %v1361, %v1363
    %v1365 = vrot.slane %v1351, %v1364
    %v1366 = vcombine.low %v331, %v353
    %v1367 = vcombine.high %v331, %v353
    %v1369 = vunpack.c.l.s4 1983009808
    %v1370 = vunpack.c.0.s8 %v1369
    %v1371 = vlaneseq
    %v1372 = vshrl.u32 %v1371, 7
    %v1373 = vsub.s32 %v1370, %v1372
    %v1374 = vrot.slane %v1366, %v1373
    %v1376 = vunpack.c.l.s4 1983009808
    %v1377 = vunpack.c.0.s8 %v1376
    %v1378 = vlaneseq
    %v1379 = vshrl.u32 %v1378, 7
    %v1380 = vsub.s32 %v1377, %v1379
    %v1381 = vrot.slane %v1367, %v1380
    %v1382 = vcombine.low %v364, %v386
    %v1383 = vcombine.high %v364, %v386
    %v1385 = vunpack.c.l.s4 1983009808
    %v1386 = vunpack.c.0.s8 %v1385
    %v1387 = vlaneseq
    %v1388 = vshrl.u32 %v1387, 7
    %v1389 = vsub.s32 %v1386, %v1388
    %v1390 = vrot.slane %v1382, %v1389
    %v1392 = vunpack.c.l.s4 1983009808
    %v1393 = vunpack.c.0.s8 %v1392
    %v1394 = vlaneseq
    %v1395 = vshrl.u32 %v1394, 7
    %v1396 = vsub.s32 %v1393, %v1395
    %v1397 = vrot.slane %v1383, %v1396
    %v1398 = vcombine.low %v375, %v397
    %v1399 = vcombine.high %v375, %v397
    %v1401 = vunpack.c.l.s4 1983009808
    %v1402 = vunpack.c.0.s8 %v1401
    %v1403 = vlaneseq
    %v1404 = vshrl.u32 %v1403, 7
    %v1405 = vsub.s32 %v1402, %v1404
    %v1406 = vrot.slane %v1398, %v1405
    %v1408 = vunpack.c.l.s4 1983009808
    %v1409 = vunpack.c.0.s8 %v1408
    %v1410 = vlaneseq
    %v1411 = vshrl.u32 %v1410, 7
    %v1412 = vsub.s32 %v1409, %v1411
    %v1413 = vrot.slane %v1399, %v1412
    %v1414 = vcombine.low %v1358, %v1374
    %v1415 = vcombine.high %v1358, %v1374
    %v1417 = vunpack.c.l.s4 1934713408
    %v1418 = vunpack.c.0.s8 %v1417
    %v1419 = vlaneseq
    %v1420 = vshrl.u32 %v1419, 7
    %v1421 = vsub.s32 %v1418, %v1420
    %v1422 = vrot.slane %v1414, %v1421
    %v1424 = vunpack.c.l.s4 1934713408
    %v1425 = vunpack.c.0.s8 %v1424
    %v1426 = vlaneseq
    %v1427 = vshrl.u32 %v1426, 7
    %v1428 = vsub.s32 %v1425, %v1427
    %v1429 = vrot.slane %v1415, %v1428
    %v1430 = vcombine.low %v1365, %v1381
    %v1431 = vcombine.high %v1365, %v1381
    %v1433 = vunpack.c.l.s4 1934713408
    %v1434 = vunpack.c.0.s8 %v1433
    %v1435 = vlaneseq
    %v1436 = vshrl.u32 %v1435, 7
    %v1437 = vsub.s32 %v1434, %v1436
    %v1438 = vrot.slane %v1430, %v1437
    %v1440 = vunpack.c.l.s4 1934713408
    %v1441 = vunpack.c.0.s8 %v1440
    %v1442 = vlaneseq
    %v1443 = vshrl.u32 %v1442, 7
    %v1444 = vsub.s32 %v1441, %v1443
    %v1445 = vrot.slane %v1431, %v1444
    %v1446 = vcombine.low %v1390, %v1406
    %v1447 = vcombine.high %v1390, %v1406
    %v1449 = vunpack.c.l.s4 1934713408
    %v1450 = vunpack.c.0.s8 %v1449
    %v1451 = vlaneseq
    %v1452 = vshrl.u32 %v1451, 7
    %v1453 = vsub.s32 %v1450, %v1452
    %v1454 = vrot.slane %v1446, %v1453
    %v1456 = vunpack.c.l.s4 1934713408
    %v1457 = vunpack.c.0.s8 %v1456
    %v1458 = vlaneseq
    %v1459 = vshrl.u32 %v1458, 7
    %v1460 = vsub.s32 %v1457, %v1459
    %v1461 = vrot.slane %v1447, %v1460
    %v1462 = vcombine.low %v1397, %v1413
    %v1463 = vcombine.high %v1397, %v1413
    %v1465 = vunpack.c.l.s4 1934713408
    %v1466 = vunpack.c.0.s8 %v1465
    %v1467 = vlaneseq
    %v1468 = vshrl.u32 %v1467, 7
    %v1469 = vsub.s32 %v1466, %v1468
    %v1470 = vrot.slane %v1462, %v1469
    %v1472 = vunpack.c.l.s4 1934713408
    %v1473 = vunpack.c.0.s8 %v1472
    %v1474 = vlaneseq
    %v1475 = vshrl.u32 %v1474, 7
    %v1476 = vsub.s32 %v1473, %v1475
    %v1477 = vrot.slane %v1463, %v1476
    %v1478 = vcombine.low %v1422, %v1454
    %v1479 = vcombine.high %v1422, %v1454
    %v1480 = vcombine.low %v1429, %v1461
    %v1481 = vcombine.high %v1429, %v1461
    %v1482 = vcombine.low %v1438, %v1470
    %v1483 = vcombine.high %v1438, %v1470
    %v1484 = vcombine.low %v1445, %v1477
    %v1485 = vcombine.high %v1445, %v1477
    %1490 = vrot.lane.b32.xlu0 %v527, 16
    %v1491 = vpop.permute.xlu0 %1490
    %1492 = vrot.lane.b32.xlu0 %v663, 16
    %v1493 = vpop.permute.xlu0 %1492
    %1494 = vrot.lane.b32.xlu0 %v799, 16
    %v1495 = vpop.permute.xlu0 %1494
    %1496 = vrot.lane.b32.xlu0 %v935, 16
    %v1497 = vpop.permute.xlu0 %1496
    %1506 = vrot.lane.b32.xlu0 %v528, 32
    %v1507 = vpop.permute.xlu0 %1506
    %1508 = vrot.lane.b32.xlu0 %v664, 32
    %v1509 = vpop.permute.xlu0 %1508
    %1510 = vrot.lane.b32.xlu0 %v800, 32
    %v1511 = vpop.permute.xlu0 %1510
    %1512 = vrot.lane.b32.xlu0 %v936, 32
    %v1513 = vpop.permute.xlu0 %1512
    %1522 = vrot.lane.b32.xlu0 %v529, 48
    %v1523 = vpop.permute.xlu0 %1522
    %1524 = vrot.lane.b32.xlu0 %v665, 48
    %v1525 = vpop.permute.xlu0 %1524
    %1526 = vrot.lane.b32.xlu0 %v801, 48
    %v1527 = vpop.permute.xlu0 %1526
    %1528 = vrot.lane.b32.xlu0 %v937, 48
    %v1529 = vpop.permute.xlu0 %1528
    %1538 = vrot.lane.b32.xlu0 %v530, 64
    %v1539 = vpop.permute.xlu0 %1538
    %1540 = vrot.lane.b32.xlu0 %v666, 64
    %v1541 = vpop.permute.xlu0 %1540
    %1542 = vrot.lane.b32.xlu0 %v802, 64
    %v1543 = vpop.permute.xlu0 %1542
    %1544 = vrot.lane.b32.xlu0 %v938, 64
    %v1545 = vpop.permute.xlu0 %1544
    %1554 = vrot.lane.b32.xlu0 %v531, 80
    %v1555 = vpop.permute.xlu0 %1554
    %1556 = vrot.lane.b32.xlu0 %v667, 80
    %v1557 = vpop.permute.xlu0 %1556
    %1558 = vrot.lane.b32.xlu0 %v803, 80
    %v1559 = vpop.permute.xlu0 %1558
    %1560 = vrot.lane.b32.xlu0 %v939, 80
    %v1561 = vpop.permute.xlu0 %1560
    %1570 = vrot.lane.b32.xlu0 %v532, 96
    %v1571 = vpop.permute.xlu0 %1570
    %1572 = vrot.lane.b32.xlu0 %v668, 96
    %v1573 = vpop.permute.xlu0 %1572
    %1574 = vrot.lane.b32.xlu0 %v804, 96
    %v1575 = vpop.permute.xlu0 %1574
    %1576 = vrot.lane.b32.xlu0 %v940, 96
    %v1577 = vpop.permute.xlu0 %1576
    %1586 = vrot.lane.b32.xlu0 %v533, 112
    %v1587 = vpop.permute.xlu0 %1586
    %1588 = vrot.lane.b32.xlu0 %v669, 112
    %v1589 = vpop.permute.xlu0 %1588
    %1590 = vrot.lane.b32.xlu0 %v805, 112
    %v1591 = vpop.permute.xlu0 %1590
    %1592 = vrot.lane.b32.xlu0 %v941, 112
    %v1593 = vpop.permute.xlu0 %1592
    %1602 = vrot.lane.b32.xlu0 %v1071, 16
    %v1603 = vpop.permute.xlu0 %1602
    %1604 = vrot.lane.b32.xlu0 %v1207, 16
    %v1605 = vpop.permute.xlu0 %1604
    %1606 = vrot.lane.b32.xlu0 %v1343, 16
    %v1607 = vpop.permute.xlu0 %1606
    %1608 = vrot.lane.b32.xlu0 %v1479, 16
    %v1609 = vpop.permute.xlu0 %1608
    %1618 = vrot.lane.b32.xlu0 %v1072, 32
    %v1619 = vpop.permute.xlu0 %1618
    %1620 = vrot.lane.b32.xlu0 %v1208, 32
    %v1621 = vpop.permute.xlu0 %1620
    %1622 = vrot.lane.b32.xlu0 %v1344, 32
    %v1623 = vpop.permute.xlu0 %1622
    %1624 = vrot.lane.b32.xlu0 %v1480, 32
    %v1625 = vpop.permute.xlu0 %1624
    %1634 = vrot.lane.b32.xlu0 %v1073, 48
    %v1635 = vpop.permute.xlu0 %1634
    %1636 = vrot.lane.b32.xlu0 %v1209, 48
    %v1637 = vpop.permute.xlu0 %1636
    %1638 = vrot.lane.b32.xlu0 %v1345, 48
    %v1639 = vpop.permute.xlu0 %1638
    %1640 = vrot.lane.b32.xlu0 %v1481, 48
    %v1641 = vpop.permute.xlu0 %1640
    %1650 = vrot.lane.b32.xlu0 %v1074, 64
    %v1651 = vpop.permute.xlu0 %1650
    %1652 = vrot.lane.b32.xlu0 %v1210, 64
    %v1653 = vpop.permute.xlu0 %1652
    %1654 = vrot.lane.b32.xlu0 %v1346, 64
    %v1655 = vpop.permute.xlu0 %1654
    %1656 = vrot.lane.b32.xlu0 %v1482, 64
    %v1657 = vpop.permute.xlu0 %1656
    %1666 = vrot.lane.b32.xlu0 %v1075, 80
    %v1667 = vpop.permute.xlu0 %1666
    %1668 = vrot.lane.b32.xlu0 %v1211, 80
    %v1669 = vpop.permute.xlu0 %1668
    %1670 = vrot.lane.b32.xlu0 %v1347, 80
    %v1671 = vpop.permute.xlu0 %1670
    %1672 = vrot.lane.b32.xlu0 %v1483, 80
    %v1673 = vpop.permute.xlu0 %1672
    %1682 = vrot.lane.b32.xlu0 %v1076, 96
    %v1683 = vpop.permute.xlu0 %1682
    %1684 = vrot.lane.b32.xlu0 %v1212, 96
    %v1685 = vpop.permute.xlu0 %1684
    %1686 = vrot.lane.b32.xlu0 %v1348, 96
    %v1687 = vpop.permute.xlu0 %1686
    %1688 = vrot.lane.b32.xlu0 %v1484, 96
    %v1689 = vpop.permute.xlu0 %1688
    %1698 = vrot.lane.b32.xlu0 %v1077, 112
    %v1699 = vpop.permute.xlu0 %1698
    %1700 = vrot.lane.b32.xlu0 %v1213, 112
    %v1701 = vpop.permute.xlu0 %1700
    %1702 = vrot.lane.b32.xlu0 %v1349, 112
    %v1703 = vpop.permute.xlu0 %1702
    %1704 = vrot.lane.b32.xlu0 %v1485, 112
    %v1705 = vpop.permute.xlu0 %1704
    %vm1710 = vcmask 130048
    %v1711 = vsel %vm1710, %v526, %v1491
    %v1712 = vsel %vm1710, %v662, %v1493
    %v1713 = vsel %vm1710, %v798, %v1495
    %v1714 = vsel %vm1710, %v934, %v1497
    %vm1715 = vcmask 261120
    %v1716 = vsel %vm1715, %v1711, %v1507
    %v1717 = vsel %vm1715, %v1712, %v1509
    %v1718 = vsel %vm1715, %v1713, %v1511
    %v1719 = vsel %vm1715, %v1714, %v1513
    %vm1720 = vcmask 392192
    %v1721 = vsel %vm1720, %v1716, %v1523
    %v1722 = vsel %vm1720, %v1717, %v1525
    %v1723 = vsel %vm1720, %v1718, %v1527
    %v1724 = vsel %vm1720, %v1719, %v1529
    %vm1725 = vcmask 523264
    %v1726 = vsel %vm1725, %v1721, %v1539
    %v1727 = vsel %vm1725, %v1722, %v1541
    %v1728 = vsel %vm1725, %v1723, %v1543
    %v1729 = vsel %vm1725, %v1724, %v1545
    %vm1730 = vcmask 654336
    %v1731 = vsel %vm1730, %v1726, %v1555
    %v1732 = vsel %vm1730, %v1727, %v1557
    %v1733 = vsel %vm1730, %v1728, %v1559
    %v1734 = vsel %vm1730, %v1729, %v1561
    %vm1735 = vcmask 785408
    %v1736 = vsel %vm1735, %v1731, %v1571
    %v1737 = vsel %vm1735, %v1732, %v1573
    %v1738 = vsel %vm1735, %v1733, %v1575
    %v1739 = vsel %vm1735, %v1734, %v1577
    %vm1740 = vcmask 916480
    %v1741 = vsel %vm1740, %v1736, %v1587
    %v1742 = vsel %vm1740, %v1737, %v1589
    %v1743 = vsel %vm1740, %v1738, %v1591
    %v1744 = vsel %vm1740, %v1739, %v1593
    %v1745 = vsel %vm1710, %v1070, %v1603
    %v1746 = vsel %vm1710, %v1206, %v1605
    %v1747 = vsel %vm1710, %v1342, %v1607
    %v1748 = vsel %vm1710, %v1478, %v1609
    %v1749 = vsel %vm1715, %v1745, %v1619
    %v1750 = vsel %vm1715, %v1746, %v1621
    %v1751 = vsel %vm1715, %v1747, %v1623
    %v1752 = vsel %vm1715, %v1748, %v1625
    %v1753 = vsel %vm1720, %v1749, %v1635
    %v1754 = vsel %vm1720, %v1750, %v1637
    %v1755 = vsel %vm1720, %v1751, %v1639
    %v1756 = vsel %vm1720, %v1752, %v1641
    %v1757 = vsel %vm1725, %v1753, %v1651
    %v1758 = vsel %vm1725, %v1754, %v1653
    %v1759 = vsel %vm1725, %v1755, %v1655
    %v1760 = vsel %vm1725, %v1756, %v1657
    %v1761 = vsel %vm1730, %v1757, %v1667
    %v1762 = vsel %vm1730, %v1758, %v1669
    %v1763 = vsel %vm1730, %v1759, %v1671
    %v1764 = vsel %vm1730, %v1760, %v1673
    %v1765 = vsel %vm1735, %v1761, %v1683
    %v1766 = vsel %vm1735, %v1762, %v1685
    %v1767 = vsel %vm1735, %v1763, %v1687
    %v1768 = vsel %vm1735, %v1764, %v1689
    %v1769 = vsel %vm1740, %v1765, %v1699
    %v1770 = vsel %vm1740, %v1766, %v1701
    %v1771 = vsel %vm1740, %v1767, %v1703
    %v1772 = vsel %vm1740, %v1768, %v1705
    %1773 = vst [vmem:[#allocation5 + $0x40] sm:$0xff] %v1741
    %1774 = vst [vmem:[#allocation5 + $0x48] sm:$0xff] %v1769
    %1775 = vst [vmem:[#allocation5 + $0x50] sm:$0xff] %v1742
    %1776 = vst [vmem:[#allocation5 + $0x58] sm:$0xff] %v1770
    %1777 = vst [vmem:[#allocation5 + $0x60] sm:$0xff] %v1743
    %1778 = vst [vmem:[#allocation5 + $0x68] sm:$0xff] %v1771
    %1779 = vst [vmem:[#allocation5 + $0x70] sm:$0xff] %v1744
    %1780 = vst [vmem:[#allocation5 + $0x78] sm:$0xff] %v1772
    // Predicated region
    $region14: #{tpu_custom_call.1} parent=1 // pred_check
      _
    $region15: #{tpu_custom_call.1} parent=1 // pred_check_branch
      %1782 = sbr.rel (0) target = $region17
    $region16: #{tpu_custom_call.1} parent=1 // pred_region
      %s1784 = ssub.s32 2048, 2048
      %1785 = vsyncadd [#allocation4], %s1784
      %s1786 = sshll.u32 [#allocation5], 4
      %s1787 = int_to_ptr.vmem [resolvable:$true] %s1786
      %1792 = dma.vmem_to_hbm [thread:$0]  %s1787, 2048, %s2, [#allocation4], 256, 256, 16
    $region17: #{tpu_custom_call.1} parent=1 // pred_fallthru
      _
    // Predicated region
    $region18: #{tpu_custom_call.1} parent=1 // pred_check
      _
    $region19: #{tpu_custom_call.1} parent=1 // pred_check_branch
      %1794 = sbr.rel (0) target = $region21
    $region20: #{tpu_custom_call.1} parent=1 // pred_region
      %1795 = dma.done [#allocation4], 2048
    $region21: #{tpu_custom_call.1} parent=1 // pred_fallthru
      _
    %1796 = vsyncpa [#allocation3], 1
    %1797 = vsyncpa [#allocation4], 1

</llo_original>
